<compile_context>
chip_gen: v7x
topology: tpu7x:2x2x1
jax: 0.10.0
libtpu: 0.0.40
codegen_flags: <defaults>
</compile_context>

<pallas_src>
import jax
import jax.numpy as jnp
from jax.experimental import pallas as pl
from jax.experimental.pallas import tpu as pltpu


# ------------------------- interpolation matrices --------------------------- #
def _interp_matrix(n_in, n_out):
    """Row-interpolation matrix A (n_out, n_in) for bilinear, align_corners=True.

    out = A @ in  reproduces F.interpolate(..., align_corners=True) along one
    axis.  For a fixed 2x factor this is a compile-time constant.
    """
    step = (n_in - 1) / (n_out - 1) if n_out > 1 else 0.0
    pos = jnp.arange(n_out, dtype=jnp.float32) * step
    lo = jnp.floor(pos).astype(jnp.int32)
    hi = jnp.minimum(lo + 1, n_in - 1)
    frac = pos - lo.astype(jnp.float32)
    a = jnp.zeros((n_out, n_in), jnp.float32)
    a = a.at[jnp.arange(n_out), lo].add(1.0 - frac)
    a = a.at[jnp.arange(n_out), hi].add(frac)
    return a


# ------------------------------ Pallas kernel ------------------------------- #
def _make_fused_kernel(c1, c2, c_out):
    """Fused: low-res channel mix -> 2x bilinear upsample -> high-res channel
    mix + bias + ReLU.

    VMEM blocks:
      x1_ref : (1, c1, H, W)        full low-res input (this batch)
      x2_ref : (1, c2, TH, Wout)    row tile of high-res input
      ah_ref : (TH, H)              rows of A_h for this output row tile
      awt_ref: (W, Wout)            A_w^T (full)
      o_ref  : (1, c_out, TH, Wout)
    SMEM scalars:
      w1_ref : (c_out*c1,)   w2_ref : (c_out*c2,)   b_ref : (c_out,)
    """

    def kernel(w1_ref, w2_ref, b_ref, x1_ref, x2_ref, ah_ref, awt_ref, o_ref):
        # Low-res channel mix: z1[co] = sum_ci w1[co,ci] * x1[ci]   (H, W)
        # ci-outer so each x1 channel slab is loaded from VMEM exactly once.
        z1 = [None] * c_out
        for ci in range(c1):
            xc = x1_ref[0, ci, :, :]
            for co in range(c_out):
                t = xc * w1_ref[co * c1 + ci]
                z1[co] = t if z1[co] is None else z1[co] + t

        # High-res channel mix: acc[co] = sum_cj w2[co,cj] * x2[cj]  (TH, Wout)
        acc = [None] * c_out
        for cj in range(c2):
            xc = x2_ref[0, cj, :, :]
            for co in range(c_out):
                t = xc * w2_ref[co * c2 + cj]
                acc[co] = t if acc[co] is None else acc[co] + t

        ah = ah_ref[...]
        awt = awt_ref[...]
        for co in range(c_out):
            # 2x align_corners bilinear upsample == two constant matmuls (MXU).
            up = jnp.dot(z1[co], awt, preferred_element_type=jnp.float32)
            up = jnp.dot(ah, up, preferred_element_type=jnp.float32)
            y = acc[co] + up + b_ref[co]
            o_ref[0, co, :, :] = jnp.maximum(y, 0.0).astype(o_ref.dtype)

    return kernel


# ------------------------------- JAX wrapper -------------------------------- #
def decoder_pred_forward(x1, x2, params, eps=1e-5):
    """x1: (N, C1, H, W); x2: (N, C2, 2H, 2W); returns (N, C_out, 2H, 2W)."""
    N, C1, H, W = x1.shape
    N2, C2, Hout, Wout = x2.shape
    assert N2 == N and Hout == 2 * H and Wout == 2 * W

    x1 = x1.astype(jnp.float32)
    x2 = x2.astype(jnp.float32)

    # Fold BN (eval mode) into the conv weight / bias (computed once).
    w = params["conv_weight"][:, :, 0, 0].astype(jnp.float32)       # (C_out, C1+C2)
    C_out = w.shape[0]
    scale = params["gamma"] / jnp.sqrt(params["running_var"] + eps)  # (C_out,)
    bias = (params["beta"] - params["running_mean"] * scale).astype(jnp.float32)
    w1 = (w[:, :C1] * scale[:, None]).reshape(-1)    # acts on x1 (low-res)
    w2 = (w[:, C1:] * scale[:, None]).reshape(-1)    # acts on x2 (high-res)

    # Constant separable interpolation matrices for the 2x upsample.
    ah = _interp_matrix(H, Hout)          # (Hout, H)
    awt = _interp_matrix(W, Wout).T       # (W, Wout)

    # ---- row tile over the OUTPUT H axis ----
    th = Hout
    # Guarantee >= 2 grid steps so both v7x TensorCores get work when N == 1.
    if N < 2 and Hout % 2 == 0 and (Hout // 2) % 8 == 0:
        th = Hout // 2
    # VMEM-budget-aware tile (v7x has 64 MiB physical, v5e 16 MiB scoped default).
    per_row_bytes = 4 * Wout * (C2 + C_out)           # x2 + out blocks, f32
    budget = 8 << 20                                   # per-buffer budget, 2x buffered
    while th > 8 and th % 16 == 0 and 2 * per_row_bytes * th > budget:
        th //= 2
    grid = (N, Hout // th)

    in_specs = [
        pl.BlockSpec(memory_space=pltpu.MemorySpace.SMEM),            # w1 (scalars)
        pl.BlockSpec(memory_space=pltpu.MemorySpace.SMEM),            # w2 (scalars)
        pl.BlockSpec(memory_space=pltpu.MemorySpace.SMEM),            # bias (scalars)
        pl.BlockSpec((1, C1, H, W), lambda n, r: (n, 0, 0, 0)),       # x1 (full low-res)
        pl.BlockSpec((1, C2, th, Wout), lambda n, r: (n, 0, r, 0)),   # x2 row tile
        pl.BlockSpec((th, H), lambda n, r: (r, 0)),                   # A_h row tile
        pl.BlockSpec((W, Wout), lambda n, r: (0, 0)),                 # A_w^T (full)
    ]
    out_specs = pl.BlockSpec((1, C_out, th, Wout), lambda n, r: (n, 0, r, 0))

    out = pl.pallas_call(
        _make_fused_kernel(C1, C2, C_out),
        out_shape=jax.ShapeDtypeStruct((N, C_out, Hout, Wout), jnp.float32),
        grid=grid,
        in_specs=in_specs,
        out_specs=out_specs,
        compiler_params=pltpu.CompilerParams(
            dimension_semantics=("parallel", "parallel")),
    )(w1, w2, bias, x1, x2, ah, awt)
    return out


# ------------------------------- JAX reference ------------------------------ #
def _bilinear_upsample_x2_align_corners(x):
    """NCHW -> NCHW, 2x bilinear, align_corners=True (gather-based reference)."""
    N, C, H, W = x.shape
    Ho, Wo = 2 * H, 2 * W
    ys = jnp.arange(Ho, dtype=jnp.float32) * ((H - 1) / (Ho - 1))
    xs = jnp.arange(Wo, dtype=jnp.float32) * ((W - 1) / (Wo - 1))
    y0 = jnp.floor(ys).astype(jnp.int32)
    x0 = jnp.floor(xs).astype(jnp.int32)
    y1 = jnp.minimum(y0 + 1, H - 1)
    x1i = jnp.minimum(x0 + 1, W - 1)
    wy = (ys - y0.astype(jnp.float32)).reshape(1, 1, Ho, 1)
    wx = (xs - x0.astype(jnp.float32)).reshape(1, 1, 1, Wo)
    xh = x[:, :, y0, :] * (1.0 - wy) + x[:, :, y1, :] * wy
    return xh[:, :, :, x0] * (1.0 - wx) + xh[:, :, :, x1i] * wx


def _reference_forward(x1, x2, params, eps=1e-5):
    """Pure-JAX reference following the original PyTorch op order."""
    x1_up = _bilinear_upsample_x2_align_corners(x1)
    x = jnp.concatenate([x1_up, x2], axis=1)
    w = params["conv_weight"][:, :, 0, 0]
    z = jnp.einsum("oc,nchw->nohw", w, x)
    scale = params["gamma"] / jnp.sqrt(params["running_var"] + eps)
    bias = params["beta"] - params["running_mean"] * scale
    y = z * scale[None, :, None, None] + bias[None, :, None, None]
    return jnp.maximum(y, 0.0)


# ----------------------------------- main ------------------------------------ #
if __name__ == "__main__":
    key = jax.random.PRNGKey(0)
    k1, k2, k3, k4, k5, k6, k7 = jax.random.split(key, 7)

    # x1 (2,4,8,8) is upsampled to (2,4,16,16); together with x2 (2,4,16,16)
    # the conv sees in_ch = 8; out_ch = 1 (saliency prediction head).
    N, C1, H, W = 2, 4, 8, 8
    C2 = 4
    in_ch, out_ch = C1 + C2, 1

    x1 = jax.random.normal(k1, (N, C1, H, W), dtype=jnp.float32)
    x2 = jax.random.normal(k2, (N, C2, 2 * H, 2 * W), dtype=jnp.float32)

    params = {
        "conv_weight": 0.1 * jax.random.normal(k3, (out_ch, in_ch, 1, 1), jnp.float32),
        "gamma": 1.0 + 0.05 * jax.random.normal(k4, (out_ch,), jnp.float32),
        "beta": 0.05 * jax.random.normal(k5, (out_ch,), jnp.float32),
        "running_mean": 0.05 * jax.random.normal(k6, (out_ch,), jnp.float32),
        "running_var": jnp.abs(1.0 + 0.05 * jax.random.normal(k7, (out_ch,), jnp.float32)),
    }

    out = jax.jit(decoder_pred_forward)(x1, x2, params)
    jax.block_until_ready(out)
    assert out.shape == (N, out_ch, 2 * H, 2 * W)

    ref = _reference_forward(x1, x2, params)
    err = float(jnp.max(jnp.abs(out - ref)))
    assert err < 1e-4, f"max abs error {err}"
    print("KERNEL_OK")
</pallas_src>

<mosaic_0001>
module attributes {stable_mosaic.version = 11 : i64} {
  func.func private @main(%arg0: i32) attributes {dimension_semantics = [#tpu.dimension_semantics<core_parallel>], iteration_bounds = array<i64: 2>, tpu.core_type = #tpu.core_type<sc_scalar_subcore>, window_params = []} {
    return
  }
}

module attributes {stable_mosaic.version = 11 : i64} {
  func.func private @main(%arg0: i32) attributes {dimension_semantics = [#tpu.dimension_semantics<core_parallel>], iteration_bounds = array<i64: 2>, tpu.core_type = #tpu.core_type<sc_scalar_subcore>, window_params = []} {
    return
  }
}

module attributes {stable_mosaic.version = 11 : i64} {
  func.func @kernel(%arg0: i32, %arg1: i32, %arg2: memref<4xf32, #tpu.memory_space<smem>>, %arg3: memref<4xf32, #tpu.memory_space<smem>>, %arg4: memref<1xf32, #tpu.memory_space<smem>>, %arg5: memref<1x4x8x8xf32, #tpu.memory_space<vmem>>, %arg6: memref<1x4x16x16xf32, #tpu.memory_space<vmem>>, %arg7: memref<16x8xf32, #tpu.memory_space<vmem>>, %arg8: memref<8x16xf32, #tpu.memory_space<vmem>>, %arg9: memref<1x1x16x16xf32, #tpu.memory_space<vmem>>) attributes {dimension_semantics = [#tpu.dimension_semantics<parallel>, #tpu.dimension_semantics<parallel>], iteration_bounds = array<i64: 2, 1>, scalar_prefetch = 0 : i64, scratch_operands = 0 : i64, tpu.core_type = #tpu.core_type<tc>, window_params = [{transform_indices = @transform_0, window_bounds = array<i64: 4>}, {transform_indices = @transform_1, window_bounds = array<i64: 4>}, {transform_indices = @transform_2, window_bounds = array<i64: 1>}, {transform_indices = @transform_3, window_bounds = array<i64: 1, 4, 8, 8>}, {transform_indices = @transform_4, window_bounds = array<i64: 1, 4, 16, 16>}, {transform_indices = @transform_5, window_bounds = array<i64: 16, 8>}, {pipeline_mode = #tpu.pipeline_mode<synchronous>, transform_indices = @transform_6, window_bounds = array<i64: 8, 16>}, {transform_indices = @transform_7, window_bounds = array<i64: 1, 1, 16, 16>}]} {
    %c0 = arith.constant 0 : index
    %c0_0 = arith.constant 0 : index
    %c0_1 = arith.constant 0 : index
    %c0_2 = arith.constant 0 : index
    %0 = vector.load %arg5[%c0, %c0_0, %c0_1, %c0_2] : memref<1x4x8x8xf32, #tpu.memory_space<vmem>>, vector<1x1x8x8xf32>
    %1 = vector.shape_cast %0 : vector<1x1x8x8xf32> to vector<8x8xf32>
    %c0_3 = arith.constant 0 : index
    %2 = memref.load %arg2[%c0_3] : memref<4xf32, #tpu.memory_space<smem>>
    %3 = vector.broadcast %2 : f32 to vector<8x8xf32>
    %4 = arith.mulf %1, %3 : vector<8x8xf32>
    %c0_4 = arith.constant 0 : index
    %c1 = arith.constant 1 : index
    %c0_5 = arith.constant 0 : index
    %c0_6 = arith.constant 0 : index
    %5 = vector.load %arg5[%c0_4, %c1, %c0_5, %c0_6] : memref<1x4x8x8xf32, #tpu.memory_space<vmem>>, vector<1x1x8x8xf32>
    %6 = vector.shape_cast %5 : vector<1x1x8x8xf32> to vector<8x8xf32>
    %c1_7 = arith.constant 1 : index
    %7 = memref.load %arg2[%c1_7] : memref<4xf32, #tpu.memory_space<smem>>
    %8 = vector.broadcast %7 : f32 to vector<8x8xf32>
    %9 = arith.mulf %6, %8 : vector<8x8xf32>
    %10 = arith.addf %4, %9 : vector<8x8xf32>
    %c0_8 = arith.constant 0 : index
    %c2 = arith.constant 2 : index
    %c0_9 = arith.constant 0 : index
    %c0_10 = arith.constant 0 : index
    %11 = vector.load %arg5[%c0_8, %c2, %c0_9, %c0_10] : memref<1x4x8x8xf32, #tpu.memory_space<vmem>>, vector<1x1x8x8xf32>
    %12 = vector.shape_cast %11 : vector<1x1x8x8xf32> to vector<8x8xf32>
    %c2_11 = arith.constant 2 : index
    %13 = memref.load %arg2[%c2_11] : memref<4xf32, #tpu.memory_space<smem>>
    %14 = vector.broadcast %13 : f32 to vector<8x8xf32>
    %15 = arith.mulf %12, %14 : vector<8x8xf32>
    %16 = arith.addf %10, %15 : vector<8x8xf32>
    %c0_12 = arith.constant 0 : index
    %c3 = arith.constant 3 : index
    %c0_13 = arith.constant 0 : index
    %c0_14 = arith.constant 0 : index
    %17 = vector.load %arg5[%c0_12, %c3, %c0_13, %c0_14] : memref<1x4x8x8xf32, #tpu.memory_space<vmem>>, vector<1x1x8x8xf32>
    %18 = vector.shape_cast %17 : vector<1x1x8x8xf32> to vector<8x8xf32>
    %c3_15 = arith.constant 3 : index
    %19 = memref.load %arg2[%c3_15] : memref<4xf32, #tpu.memory_space<smem>>
    %20 = vector.broadcast %19 : f32 to vector<8x8xf32>
    %21 = arith.mulf %18, %20 : vector<8x8xf32>
    %22 = arith.addf %16, %21 : vector<8x8xf32>
    %c0_16 = arith.constant 0 : index
    %c0_17 = arith.constant 0 : index
    %c0_18 = arith.constant 0 : index
    %c0_19 = arith.constant 0 : index
    %23 = vector.load %arg6[%c0_16, %c0_17, %c0_18, %c0_19] : memref<1x4x16x16xf32, #tpu.memory_space<vmem>>, vector<1x1x16x16xf32>
    %24 = vector.shape_cast %23 : vector<1x1x16x16xf32> to vector<16x16xf32>
    %c0_20 = arith.constant 0 : index
    %25 = memref.load %arg3[%c0_20] : memref<4xf32, #tpu.memory_space<smem>>
    %26 = vector.broadcast %25 : f32 to vector<16x16xf32>
    %27 = arith.mulf %24, %26 : vector<16x16xf32>
    %c0_21 = arith.constant 0 : index
    %c1_22 = arith.constant 1 : index
    %c0_23 = arith.constant 0 : index
    %c0_24 = arith.constant 0 : index
    %28 = vector.load %arg6[%c0_21, %c1_22, %c0_23, %c0_24] : memref<1x4x16x16xf32, #tpu.memory_space<vmem>>, vector<1x1x16x16xf32>
    %29 = vector.shape_cast %28 : vector<1x1x16x16xf32> to vector<16x16xf32>
    %c1_25 = arith.constant 1 : index
    %30 = memref.load %arg3[%c1_25] : memref<4xf32, #tpu.memory_space<smem>>
    %31 = vector.broadcast %30 : f32 to vector<16x16xf32>
    %32 = arith.mulf %29, %31 : vector<16x16xf32>
    %33 = arith.addf %27, %32 : vector<16x16xf32>
    %c0_26 = arith.constant 0 : index
    %c2_27 = arith.constant 2 : index
    %c0_28 = arith.constant 0 : index
    %c0_29 = arith.constant 0 : index
    %34 = vector.load %arg6[%c0_26, %c2_27, %c0_28, %c0_29] : memref<1x4x16x16xf32, #tpu.memory_space<vmem>>, vector<1x1x16x16xf32>
    %35 = vector.shape_cast %34 : vector<1x1x16x16xf32> to vector<16x16xf32>
    %c2_30 = arith.constant 2 : index
    %36 = memref.load %arg3[%c2_30] : memref<4xf32, #tpu.memory_space<smem>>
    %37 = vector.broadcast %36 : f32 to vector<16x16xf32>
    %38 = arith.mulf %35, %37 : vector<16x16xf32>
    %39 = arith.addf %33, %38 : vector<16x16xf32>
    %c0_31 = arith.constant 0 : index
    %c3_32 = arith.constant 3 : index
    %c0_33 = arith.constant 0 : index
    %c0_34 = arith.constant 0 : index
    %40 = vector.load %arg6[%c0_31, %c3_32, %c0_33, %c0_34] : memref<1x4x16x16xf32, #tpu.memory_space<vmem>>, vector<1x1x16x16xf32>
    %41 = vector.shape_cast %40 : vector<1x1x16x16xf32> to vector<16x16xf32>
    %c3_35 = arith.constant 3 : index
    %42 = memref.load %arg3[%c3_35] : memref<4xf32, #tpu.memory_space<smem>>
    %43 = vector.broadcast %42 : f32 to vector<16x16xf32>
    %44 = arith.mulf %41, %43 : vector<16x16xf32>
    %45 = arith.addf %39, %44 : vector<16x16xf32>
    %c0_36 = arith.constant 0 : index
    %c0_37 = arith.constant 0 : index
    %46 = vector.load %arg7[%c0_36, %c0_37] : memref<16x8xf32, #tpu.memory_space<vmem>>, vector<16x8xf32>
    %c0_38 = arith.constant 0 : index
    %c0_39 = arith.constant 0 : index
    %47 = vector.load %arg8[%c0_38, %c0_39] : memref<8x16xf32, #tpu.memory_space<vmem>>, vector<8x16xf32>
    %cst = arith.constant dense<0.000000e+00> : vector<8x16xf32>
    %48 = tpu.matmul %22, %47, %cst {dimension_numbers = #tpu.dot_dimension_numbers<[1], [0], [0], [1], [0, 0, 1, 1], [], []>} : vector<8x8xf32>, vector<8x16xf32>, vector<8x16xf32> -> vector<8x16xf32>
    %cst_40 = arith.constant dense<0.000000e+00> : vector<16x16xf32>
    %49 = tpu.matmul %46, %48, %cst_40 {dimension_numbers = #tpu.dot_dimension_numbers<[1], [0], [0], [1], [0, 0, 1, 1], [], []>} : vector<16x8xf32>, vector<8x16xf32>, vector<16x16xf32> -> vector<16x16xf32>
    %50 = arith.addf %45, %49 : vector<16x16xf32>
    %c0_41 = arith.constant 0 : index
    %51 = memref.load %arg4[%c0_41] : memref<1xf32, #tpu.memory_space<smem>>
    %52 = vector.broadcast %51 : f32 to vector<16x16xf32>
    %53 = arith.addf %50, %52 : vector<16x16xf32>
    %cst_42 = arith.constant 0.000000e+00 : f32
    %54 = vector.broadcast %cst_42 : f32 to vector<16x16xf32>
    %55 = arith.maximumf %53, %54 : vector<16x16xf32>
    %c0_43 = arith.constant 0 : index
    %c0_44 = arith.constant 0 : index
    %c0_45 = arith.constant 0 : index
    %c0_46 = arith.constant 0 : index
    %56 = vector.load %arg9[%c0_43, %c0_44, %c0_45, %c0_46] : memref<1x1x16x16xf32, #tpu.memory_space<vmem>>, vector<1x1x16x16xf32>
    %57 = vector.shape_cast %56 : vector<1x1x16x16xf32> to vector<16x16xf32>
    %58 = vector.shape_cast %55 : vector<16x16xf32> to vector<1x1x16x16xf32>
    tpu.vector_store %arg9[%c0_43, %c0_44, %c0_45, %c0_46], %58 {strides = array<i32>} : memref<1x1x16x16xf32, #tpu.memory_space<vmem>>, vector<1x1x16x16xf32>,
    return
  }
  func.func @transform_0(%arg0: i32, %arg1: i32) -> i32 {
    %c0_i32 = arith.constant 0 : i32
    %c0_i32_0 = arith.constant 0 : i32
    return %c0_i32 : i32
  }
  func.func @transform_1(%arg0: i32, %arg1: i32) -> i32 {
    %c0_i32 = arith.constant 0 : i32
    %c0_i32_0 = arith.constant 0 : i32
    return %c0_i32 : i32
  }
  func.func @transform_2(%arg0: i32, %arg1: i32) -> i32 {
    %c0_i32 = arith.constant 0 : i32
    %c0_i32_0 = arith.constant 0 : i32
    return %c0_i32 : i32
  }
  func.func @transform_3(%arg0: i32, %arg1: i32) -> (i32, i32, i32, i32) {
    %c0_i32 = arith.constant 0 : i32
    %c0_i32_0 = arith.constant 0 : i32
    %c0_i32_1 = arith.constant 0 : i32
    %c0_i32_2 = arith.constant 0 : i32
    return %arg0, %c0_i32, %c0_i32_0, %c0_i32_1 : i32, i32, i32, i32
  }
  func.func @transform_4(%arg0: i32, %arg1: i32) -> (i32, i32, i32, i32) {
    %c0_i32 = arith.constant 0 : i32
    %c0_i32_0 = arith.constant 0 : i32
    %c0_i32_1 = arith.constant 0 : i32
    return %arg0, %c0_i32, %arg1, %c0_i32_0 : i32, i32, i32, i32
  }
  func.func @transform_5(%arg0: i32, %arg1: i32) -> (i32, i32) {
    %c0_i32 = arith.constant 0 : i32
    %c0_i32_0 = arith.constant 0 : i32
    return %arg1, %c0_i32 : i32, i32
  }
  func.func @transform_6(%arg0: i32, %arg1: i32) -> (i32, i32) {
    %c0_i32 = arith.constant 0 : i32
    %c0_i32_0 = arith.constant 0 : i32
    %c0_i32_1 = arith.constant 0 : i32
    return %c0_i32, %c0_i32_0 : i32, i32
  }
  func.func @transform_7(%arg0: i32, %arg1: i32) -> (i32, i32, i32, i32) {
    %c0_i32 = arith.constant 0 : i32
    %c0_i32_0 = arith.constant 0 : i32
    %c0_i32_1 = arith.constant 0 : i32
    return %arg0, %c0_i32, %arg1, %c0_i32_0 : i32, i32, i32, i32
  }
}

</mosaic_0001>

<llo_original>
// kernel: decoder_pred_forward.1
$region0: #{decoder_pred_forward.1}
  #allocation0 [shape = 'u32[]', space=smem, size = 0x4, offset = 0x4, fixed_abs, tag = 'smem constant byte address 0x4 - core index']
  #allocation1 [shape = 'u32[144,128]{1,0:T(1,128)}', space=vmem, size = 0x12000, scoped, tag = 'internal scratch']
  #allocation2 [shape = 'f32[1]{0:T(128)S(6)}', space=smem, size = 0x200, scoped, tag = 'scoped memory for decoder_pred_forward.1']
  %s0 = inlined_call_operand.vmem [shape: f32[4], index: 0, kind: input, shape index: {}]
  %s1 = inlined_call_operand.vmem [shape: f32[4], index: 1, kind: input, shape index: {}]
  %s2 = inlined_call_operand.<no memory space> [shape: f32[1], index: 2, kind: input, shape index: {}]
  %s3 = inlined_call_operand.vmem [shape: f32[2,4,8,8], index: 3, kind: input, shape index: {}]
  %s4 = inlined_call_operand.vmem [shape: f32[2,4,16,16], index: 4, kind: input, shape index: {}]
  %s5 = inlined_call_operand.vmem [shape: f32[16,8], index: 5, kind: input, shape index: {}]
  %s6 = inlined_call_operand.vmem [shape: f32[8,16], index: 6, kind: input, shape index: {}]
  %s7 = inlined_call_operand.hbm [shape: f32[2,1,16,16], index: 7, kind: output, shape index: {}]
  %s8 = sld [smem:[#allocation0]]
  $region69: #{decoder_pred_forward.1} parent=0
    _
  %s10 = ssub.s32 1, %s8
  %s11 = scalar_select 0, %s10, %s8
  %12 = sst [smem:[#allocation2]] %s2
  $region1: #{decoder_pred_forward.1} parent=0
    #allocation3 [shape = 'u8[512]{0}', space=smem, size = 0x200, scoped, tag = 'input window, operand 0, single buffered']
    #allocation4 [shape = 's32[2]{0}', space=sflag, size = 0x8, scoped, tag = 'scoped memory for decoder_pred_forward.1']
    #allocation5 [shape = 's32[2]{0}', space=sflag, size = 0x8, scoped, tag = 'scoped memory for decoder_pred_forward.1']
    #allocation6 [shape = 'u8[512]{0}', space=smem, size = 0x200, scoped, tag = 'input window, operand 1, single buffered']
    #allocation7 [shape = 's32[1]{0}', space=sflag, size = 0x4, scoped, tag = 'scoped memory for decoder_pred_forward.1']
    #allocation8 [shape = 'u8[16384]{0}', space=vmem, size = 0x4000, scoped, tag = 'output window, operand 0']
    %13 = vsyncpa [#allocation5], 0
    %14 = vsyncpa [#allocation7], 0
    %15 = vsyncpa [#allocation4], 0
    %s16 = scalar_lea.sflag [#allocation4], 1
    %17 = vsyncpa %s16, 0
    loop: start=0, step=1, limit=4
    $region2: #{decoder_pred_forward.1} parent=1 // loop_pre_header
      _
    $region3: #{decoder_pred_forward.1} parent=1 // loop_header
      %s19 = sphi 0, %s23
      %p20 = scmp.ge.s32.totalorder %s19, 4
      %s26 = sphi 0, %s38
      %s27 = sphi 0, %s34
      %s28 = sphi 0, %s26
      %s29 = sphi 0, %s27
      %s30 = sphi 0, %s28
      %s31 = sphi 0, %s29
      %s39 = sphi 0, %s39
      %s41 = sphi 0, %s39
      %s42 = sphi 0, %s41
      %s56 = sphi 0, %s42
      %s60 = sphi 0, %s60
      %s62 = sphi 0, %s60
      %s63 = sphi 0, %s62
      %s77 = sphi 0, %s63
      %s81 = sphi 0, %s81
      %s83 = sphi 0, %s81
      %s84 = sphi 0, %s83
      %s98 = sphi 0, %s84
      %s104 = sphi 0, %s106
      %s107 = sphi 0, %s104
      %s108 = sphi 0, %s107
      %s124 = sphi 0, %s108
      %s132 = sphi 0, %s134
      %s135 = sphi 0, %s132
      %s136 = sphi 0, %s135
      %s152 = sphi 0, %s136
      %s158 = sphi 0, %s160
      %s161 = sphi 0, %s158
      %s162 = sphi 0, %s161
      %s178 = sphi 0, %s162
      %s182 = sphi 0, %s182
      %s184 = sphi 0, %s182
      %s185 = sphi 0, %s184
      %s199 = sphi 0, %s185
      %s207 = sphi 0, %s209
      %s210 = sphi 0, %s207
      %s211 = sphi 0, %s210
      %s227 = sphi 0, %s211
    $region4: #{decoder_pred_forward.1} parent=1 // loop_header_branch
      %22 = sbr.rel (%p20) target = $region8
    $region5: #{decoder_pred_forward.1} parent=1 // loop_body
      %s24 = ssub.s32 %s19, 1
      %s25 = ssub.s32 %s19, 2
      %s32 = sadd.s32 1, %s27
      %p33 = scmp.ge.s32.totalorder %s32, 1
      %s34 = scalar_select %p33, 0, %s32
      %s35 = sadd.s32 1, %s26
      %s36 = scalar_select %p33, %s35, %s26
      %p37 = scmp.ge.s32.totalorder %s36, 2
      %s38 = scalar_select %p37, 0, %s36
      %s40 = sadd.s32 %s39, 1
      %p43 = scmp.eq.s32.totalorder %s19, 1
      %p44 = scmp.ne.s32.totalorder %s39, %s41
      %p45 = scmp.eq.s32.totalorder %s19, 0
      %p46 = por %p44, %p45
      %p47 = scmp.ne.s32.totalorder %s39, %s41
      %p48 = scmp.eq.s32.totalorder %s24, 1
      %p49 = por %p47, %p48
      %p50 = scmp.ne.s32.totalorder %s41, %s42
      %p51 = scmp.eq.s32.totalorder %s24, 0
      %p52 = por %p50, %p51
      %p53 = scmp.ne.s32.totalorder %s41, %s42
      %p54 = scmp.eq.s32.totalorder %s25, 1
      %p55 = por %p53, %p54
      %p57 = scmp.ne.s32.totalorder %s42, %s56
      %p58 = scmp.eq.s32.totalorder %s25, 0
      %p59 = por %p57, %p58
      %s61 = sadd.s32 %s60, 1
      %p64 = scmp.eq.s32.totalorder %s19, 1
      %p65 = scmp.ne.s32.totalorder %s60, %s62
      %p66 = scmp.eq.s32.totalorder %s19, 0
      %p67 = por %p65, %p66
      %p68 = scmp.ne.s32.totalorder %s60, %s62
      %p69 = scmp.eq.s32.totalorder %s24, 1
      %p70 = por %p68, %p69
      %p71 = scmp.ne.s32.totalorder %s62, %s63
      %p72 = scmp.eq.s32.totalorder %s24, 0
      %p73 = por %p71, %p72
      %p74 = scmp.ne.s32.totalorder %s62, %s63
      %p75 = scmp.eq.s32.totalorder %s25, 1
      %p76 = por %p74, %p75
      %p78 = scmp.ne.s32.totalorder %s63, %s77
      %p79 = scmp.eq.s32.totalorder %s25, 0
      %p80 = por %p78, %p79
      %s82 = sadd.s32 %s81, 1
      %p85 = scmp.eq.s32.totalorder %s19, 1
      %p86 = scmp.ne.s32.totalorder %s81, %s83
      %p87 = scmp.eq.s32.totalorder %s19, 0
      %p88 = por %p86, %p87
      %p89 = scmp.ne.s32.totalorder %s81, %s83
      %p90 = scmp.eq.s32.totalorder %s24, 1
      %p91 = por %p89, %p90
      %p92 = scmp.ne.s32.totalorder %s83, %s84
      %p93 = scmp.eq.s32.totalorder %s24, 0
      %p94 = por %p92, %p93
      %p95 = scmp.ne.s32.totalorder %s83, %s84
      %p96 = scmp.eq.s32.totalorder %s25, 1
      %p97 = por %p95, %p96
      %p99 = scmp.ne.s32.totalorder %s84, %s98
      %p100 = scmp.eq.s32.totalorder %s25, 0
      %p101 = por %p99, %p100
      %s102 = ssub.s32 %s26, %s38
      %p103 = scmp.eq.s32.totalorder %s102, 0
      %s105 = sadd.s32 %s104, 1
      %s106 = scalar_select %p103, %s104, %s105
      %p109 = pneg %p103
      %p110 = scmp.eq.s32.totalorder %s19, 1
      %p111 = por %p109, %p110
      %p112 = scmp.ne.s32.totalorder %s104, %s107
      %p113 = scmp.eq.s32.totalorder %s19, 0
      %p114 = por %p112, %p113
      %p115 = scmp.ne.s32.totalorder %s104, %s107
      %p116 = scmp.eq.s32.totalorder %s24, 1
      %p117 = por %p115, %p116
      %p118 = scmp.ne.s32.totalorder %s107, %s108
      %p119 = scmp.eq.s32.totalorder %s24, 0
      %p120 = por %p118, %p119
      %p121 = scmp.ne.s32.totalorder %s107, %s108
      %p122 = scmp.eq.s32.totalorder %s25, 1
      %p123 = por %p121, %p122
      %p125 = scmp.ne.s32.totalorder %s108, %s124
      %p126 = scmp.eq.s32.totalorder %s25, 0
      %p127 = por %p125, %p126
      %s128 = ssub.s32 %s26, %s38
      %s129 = ssub.s32 %s27, %s34
      %s130 = sor.u32 %s128, %s129
      %p131 = scmp.eq.s32.totalorder %s130, 0
      %s133 = sadd.s32 %s132, 1
      %s134 = scalar_select %p131, %s132, %s133
      %p137 = pneg %p131
      %p138 = scmp.eq.s32.totalorder %s19, 1
      %p139 = por %p137, %p138
      %p140 = scmp.ne.s32.totalorder %s132, %s135
      %p141 = scmp.eq.s32.totalorder %s19, 0
      %p142 = por %p140, %p141
      %p143 = scmp.ne.s32.totalorder %s132, %s135
      %p144 = scmp.eq.s32.totalorder %s24, 1
      %p145 = por %p143, %p144
      %p146 = scmp.ne.s32.totalorder %s135, %s136
      %p147 = scmp.eq.s32.totalorder %s24, 0
      %p148 = por %p146, %p147
      %p149 = scmp.ne.s32.totalorder %s135, %s136
      %p150 = scmp.eq.s32.totalorder %s25, 1
      %p151 = por %p149, %p150
      %p153 = scmp.ne.s32.totalorder %s136, %s152
      %p154 = scmp.eq.s32.totalorder %s25, 0
      %p155 = por %p153, %p154
      %s156 = ssub.s32 %s27, %s34
      %p157 = scmp.eq.s32.totalorder %s156, 0
      %s159 = sadd.s32 %s158, 1
      %s160 = scalar_select %p157, %s158, %s159
      %p163 = pneg %p157
      %p164 = scmp.eq.s32.totalorder %s19, 1
      %p165 = por %p163, %p164
      %p166 = scmp.ne.s32.totalorder %s158, %s161
      %p167 = scmp.eq.s32.totalorder %s19, 0
      %p168 = por %p166, %p167
      %p169 = scmp.ne.s32.totalorder %s158, %s161
      %p170 = scmp.eq.s32.totalorder %s24, 1
      %p171 = por %p169, %p170
      %p172 = scmp.ne.s32.totalorder %s161, %s162
      %p173 = scmp.eq.s32.totalorder %s24, 0
      %p174 = por %p172, %p173
      %p175 = scmp.ne.s32.totalorder %s161, %s162
      %p176 = scmp.eq.s32.totalorder %s25, 1
      %p177 = por %p175, %p176
      %p179 = scmp.ne.s32.totalorder %s162, %s178
      %p180 = scmp.eq.s32.totalorder %s25, 0
      %p181 = por %p179, %p180
      %s183 = sadd.s32 %s182, 1
      %p186 = scmp.eq.s32.totalorder %s19, 1
      %p187 = scmp.ne.s32.totalorder %s182, %s184
      %p188 = scmp.eq.s32.totalorder %s19, 0
      %p189 = por %p187, %p188
      %p190 = scmp.ne.s32.totalorder %s182, %s184
      %p191 = scmp.eq.s32.totalorder %s24, 1
      %p192 = por %p190, %p191
      %p193 = scmp.ne.s32.totalorder %s184, %s185
      %p194 = scmp.eq.s32.totalorder %s24, 0
      %p195 = por %p193, %p194
      %p196 = scmp.ne.s32.totalorder %s184, %s185
      %p197 = scmp.eq.s32.totalorder %s25, 1
      %p198 = por %p196, %p197
      %p200 = scmp.ne.s32.totalorder %s185, %s199
      %p201 = scmp.eq.s32.totalorder %s25, 0
      %p202 = por %p200, %p201
      %s203 = ssub.s32 %s26, %s38
      %s204 = ssub.s32 %s27, %s34
      %s205 = sor.u32 %s203, %s204
      %p206 = scmp.eq.s32.totalorder %s205, 0
      %s208 = sadd.s32 %s207, 1
      %s209 = scalar_select %p206, %s207, %s208
      %p212 = pneg %p206
      %p213 = scmp.eq.s32.totalorder %s19, 1
      %p214 = por %p212, %p213
      %p215 = scmp.ne.s32.totalorder %s207, %s210
      %p216 = scmp.eq.s32.totalorder %s19, 0
      %p217 = por %p215, %p216
      %p218 = scmp.ne.s32.totalorder %s207, %s210
      %p219 = scmp.eq.s32.totalorder %s24, 1
      %p220 = por %p218, %p219
      %p221 = scmp.ne.s32.totalorder %s210, %s211
      %p222 = scmp.eq.s32.totalorder %s24, 0
      %p223 = por %p221, %p222
      %p224 = scmp.ne.s32.totalorder %s210, %s211
      %p225 = scmp.eq.s32.totalorder %s25, 1
      %p226 = por %p224, %p225
      %p228 = scmp.ne.s32.totalorder %s211, %s227
      %p229 = scmp.eq.s32.totalorder %s25, 0
      %p230 = por %p228, %p229
      %p231 = scmp.le.s32.totalorder 1, %s19
      %p232 = scmp.lt.s32.totalorder %s19, 3
      %p233 = pnand %p231, %p232
      %p234 = pneg %p233
      // Predicated region
      $region9: #{decoder_pred_forward.1} parent=5 // pred_check
        _
      $region10: #{decoder_pred_forward.1} parent=5 // pred_check_branch
        %236 = sbr.rel (%p233) target = $region12
      $region11: #{decoder_pred_forward.1} parent=5 // pred_region
        %s237 = ssub.s32 %s19, 1
        // Predicated region
        $region13: #{decoder_pred_forward.1} parent=11 // pred_check
          %p238 = pneg %p52
        $region14: #{decoder_pred_forward.1} parent=11 // pred_check_branch
          %240 = sbr.rel (%p238) target = $region16
        $region15: #{decoder_pred_forward.1} parent=11 // pred_region
          %s242 = ssub.s32 16, 16
          %243 = vsyncadd [#allocation5], %s242
          %s245 = sshll.u32 %s0, 4
          %s246 = int_to_ptr.vmem [resolvable:$true] %s245
          %248 = dma.vmem_to_smem %s246, 16, [#allocation3], [#allocation5]
        $region16: #{decoder_pred_forward.1} parent=11 // pred_fallthru
          _
        // Predicated region
        $region17: #{decoder_pred_forward.1} parent=11 // pred_check
          %p249 = pneg %p73
        $region18: #{decoder_pred_forward.1} parent=11 // pred_check_branch
          %251 = sbr.rel (%p249) target = $region20
        $region19: #{decoder_pred_forward.1} parent=11 // pred_region
          %s253 = ssub.s32 16, 16
          %254 = vsyncadd [#allocation7], %s253
          %s256 = sshll.u32 %s1, 4
          %s257 = int_to_ptr.vmem [resolvable:$true] %s256
          %259 = dma.vmem_to_smem %s257, 16, [#allocation6], [#allocation7]
        $region20: #{decoder_pred_forward.1} parent=11 // pred_fallthru
          _
        // Predicated region
        $region21: #{decoder_pred_forward.1} parent=11 // pred_check
          %p260 = pneg %p94
        $region22: #{decoder_pred_forward.1} parent=11 // pred_check_branch
          %262 = sbr.rel (%p260) target = $region24
        $region23: #{decoder_pred_forward.1} parent=11 // pred_region
          _
        $region24: #{decoder_pred_forward.1} parent=11 // pred_fallthru
          _
        // Predicated region
        $region25: #{decoder_pred_forward.1} parent=11 // pred_check
          %p263 = pneg %p174
        $region26: #{decoder_pred_forward.1} parent=11 // pred_check_branch
          %265 = sbr.rel (%p263) target = $region28
        $region27: #{decoder_pred_forward.1} parent=11 // pred_region
          %s266 = smul.u32 2, %s29
          %p267 = scmp.lt.s32.totalorder %s266, 1
          %s268 = scalar_select %p267, %s266, 1
          %s269 = smul.addr %s268, 8
          %s270 = scalar_lea.vmem %s5, %s269
          %s271 = smul.u32 2, %s29
        $region28: #{decoder_pred_forward.1} parent=11 // pred_fallthru
          _
        // Predicated region
        $region29: #{decoder_pred_forward.1} parent=11 // pred_check
          %p272 = pneg %p195
        $region30: #{decoder_pred_forward.1} parent=11 // pred_check_branch
          %274 = sbr.rel (%p272) target = $region32
        $region31: #{decoder_pred_forward.1} parent=11 // pred_region
          _
        $region32: #{decoder_pred_forward.1} parent=11 // pred_fallthru
          _
      $region12: #{decoder_pred_forward.1} parent=5 // pred_fallthru
        _
      %p275 = scmp.lt.s32.totalorder %s19, 2
      // Predicated region
      $region33: #{decoder_pred_forward.1} parent=5 // pred_check
        %p276 = pneg %p275
      $region34: #{decoder_pred_forward.1} parent=5 // pred_check_branch
        %278 = sbr.rel (%p276) target = $region36
      $region35: #{decoder_pred_forward.1} parent=5 // pred_region
        // Predicated region
        $region37: #{decoder_pred_forward.1} parent=35 // pred_check
          %p279 = pneg %p114
        $region38: #{decoder_pred_forward.1} parent=35 // pred_check_branch
          %281 = sbr.rel (%p279) target = $region40
        $region39: #{decoder_pred_forward.1} parent=35 // pred_region
          %p282 = scmp.lt.s32.totalorder %s26, 1
          %s283 = scalar_select %p282, %s26, 1
          %s284 = smul.addr %s283, 4
          %s285 = smul.addr %s284, 8
          %s286 = scalar_lea.vmem %s3, %s285
        $region40: #{decoder_pred_forward.1} parent=35 // pred_fallthru
          _
        // Predicated region
        $region41: #{decoder_pred_forward.1} parent=35 // pred_check
          %p287 = pneg %p142
        $region42: #{decoder_pred_forward.1} parent=35 // pred_check_branch
          %289 = sbr.rel (%p287) target = $region44
        $region43: #{decoder_pred_forward.1} parent=35 // pred_region
          %s290 = smul.u32 2, %s27
          %p291 = scmp.lt.s32.totalorder %s26, 1
          %s292 = scalar_select %p291, %s26, 1
          %p293 = scmp.lt.s32.totalorder %s290, 1
          %s294 = scalar_select %p293, %s290, 1
          %s295 = smul.addr %s292, 8
          %s296 = sadd.s32 %s294, %s295
          %s297 = smul.addr %s296, 8
          %s298 = scalar_lea.vmem %s4, %s297
          %s299 = smul.u32 2, %s27
        $region44: #{decoder_pred_forward.1} parent=35 // pred_fallthru
          _
      $region36: #{decoder_pred_forward.1} parent=5 // pred_fallthru
        _
      %p300 = scmp.le.s32.totalorder 1, %s19
      %p301 = scmp.lt.s32.totalorder %s19, 3
      %p302 = pnand %p300, %p301
      %p303 = pneg %p302
      // Predicated region
      $region45: #{decoder_pred_forward.1} parent=5 // pred_check
        _
      $region46: #{decoder_pred_forward.1} parent=5 // pred_check_branch
        %305 = sbr.rel (%p302) target = $region48
      $region47: #{decoder_pred_forward.1} parent=5 // pred_region
        %s306 = ssub.s32 %s19, 1
        // Predicated region
        $region49: #{decoder_pred_forward.1} parent=47 // pred_check
          %p307 = pneg %p52
        $region50: #{decoder_pred_forward.1} parent=47 // pred_check_branch
          %309 = sbr.rel (%p307) target = $region52
        $region51: #{decoder_pred_forward.1} parent=47 // pred_region
          %310 = dma.done [#allocation5], 16
        $region52: #{decoder_pred_forward.1} parent=47 // pred_fallthru
          _
        // Predicated region
        $region53: #{decoder_pred_forward.1} parent=47 // pred_check
          %p311 = pneg %p73
        $region54: #{decoder_pred_forward.1} parent=47 // pred_check_branch
          %313 = sbr.rel (%p311) target = $region56
        $region55: #{decoder_pred_forward.1} parent=47 // pred_region
          %314 = dma.done [#allocation7], 16
        $region56: #{decoder_pred_forward.1} parent=47 // pred_fallthru
          _
        %315 = sfence
        %p316 = pneg %p52
        %p317 = pneg %p49
        %p318 = pneg %p73
        %p319 = pneg %p70
        %p320 = pneg %p94
        %p321 = pneg %p91
        %p322 = scmp.lt.s32.totalorder %s28, 1
        %s323 = scalar_select %p322, %s28, 1
        %s324 = smul.addr %s323, 4
        %s325 = smul.addr %s324, 8
        %s326 = scalar_lea.vmem %s3, %s325
        %p327 = pneg %p120
        %p328 = pneg %p117
        %s329 = smul.u32 2, %s29
        %p330 = scmp.lt.s32.totalorder %s28, 1
        %s331 = scalar_select %p330, %s28, 1
        %p332 = scmp.lt.s32.totalorder %s329, 1
        %s333 = scalar_select %p332, %s329, 1
        %s334 = smul.addr %s331, 8
        %s335 = sadd.s32 %s333, %s334
        %s336 = smul.addr %s335, 8
        %s337 = scalar_lea.vmem %s4, %s336
        %p338 = pneg %p148
        %p339 = pneg %p145
        %s340 = smul.u32 2, %s29
        %p341 = scmp.lt.s32.totalorder %s340, 1
        %s342 = scalar_select %p341, %s340, 1
        %s343 = smul.addr %s342, 8
        %s344 = scalar_lea.vmem %s5, %s343
        %p345 = pneg %p174
        %p346 = pneg %p171
        %p347 = pneg %p195
        %p348 = pneg %p192
        %p349 = pneg %p223
        %p350 = pneg %p220
        %s351 = sand.u32 %s210, 1
        %s352 = scalar_lea.sflag [#allocation4], %s351
        %s353 = sand.u32 %s210, 1
        %s354 = smul.addr %s353, 16
        %s355 = scalar_lea.vmem [#allocation8], %s354
        %p356 = scmp.lt.s32.totalorder %s28, 1
        %s357 = scalar_select %p356, %s28, 1
        %s358 = smul.addr %s357, 4
        %s359 = smul.addr %s358, 8
        %s360 = scalar_lea.vmem %s3, %s359
        %s361 = smul.u32 2, %s29
        %p362 = scmp.lt.s32.totalorder %s28, 1
        %s363 = scalar_select %p362, %s28, 1
        %p364 = scmp.lt.s32.totalorder %s361, 1
        %s365 = scalar_select %p364, %s361, 1
        %s366 = smul.addr %s363, 8
        %s367 = sadd.s32 %s365, %s366
        %s368 = smul.addr %s367, 8
        %s369 = scalar_lea.vmem %s4, %s368
        %s370 = smul.u32 2, %s29
        %s371 = smul.u32 2, %s29
        %p372 = scmp.lt.s32.totalorder %s371, 1
        %s373 = scalar_select %p372, %s371, 1
        %s374 = smul.addr %s373, 8
        %s375 = scalar_lea.vmem %s5, %s374
        %s376 = smul.u32 2, %s29
        %s377 = smul.u32 2, %s29
        %v378 = vld [vmem:[%s360] sm:$0xff]
        %s379 = sld [smem:[#allocation3]]
        %v380 = vstv %s379
        %v381 = vmul.f32 %v378, %v380
        %s382 = scalar_lea.vmem %s360, 8
        %v383 = vld [vmem:[%s382] sm:$0xff]
        %s384 = sld [smem:[#allocation3 + $0x1]]
        %v385 = vstv %s384
        %v386 = vmul.f32 %v383, %v385
        %v387 = vadd.f32 %v381, %v386
        %s388 = scalar_lea.vmem %s360, 16
        %v389 = vld [vmem:[%s388] sm:$0xff]
        %s390 = sld [smem:[#allocation3 + $0x2]]
        %v391 = vstv %s390
        %v392 = vmul.f32 %v389, %v391
        %v393 = vadd.f32 %v387, %v392
        %s394 = scalar_lea.vmem %s360, 24
        %v395 = vld [vmem:[%s394] sm:$0xff]
        %s396 = sld [smem:[#allocation3 + $0x3]]
        %v397 = vstv %s396
        %v398 = vmul.f32 %v395, %v397
        %v399 = vadd.f32 %v393, %v398
        %v400 = vld [vmem:[%s369] sm:$0xff]
        %v401 = vld [vmem:[%s369 + $0x8] sm:$0xff]
        %s402 = sld [smem:[#allocation6]]
        %v403 = vstv %s402
        %v404 = vmul.f32 %v400, %v403
        %v405 = vmul.f32 %v401, %v403
        %s406 = scalar_lea.vmem %s369, 16
        %v407 = vld [vmem:[%s406] sm:$0xff]
        %v408 = vld [vmem:[%s406 + $0x8] sm:$0xff]
        %s409 = sld [smem:[#allocation6 + $0x1]]
        %v410 = vstv %s409
        %v411 = vmul.f32 %v407, %v410
        %v412 = vmul.f32 %v408, %v410
        %v413 = vadd.f32 %v404, %v411
        %v414 = vadd.f32 %v405, %v412
        %s415 = scalar_lea.vmem %s369, 32
        %v416 = vld [vmem:[%s415] sm:$0xff]
        %v417 = vld [vmem:[%s415 + $0x8] sm:$0xff]
        %s418 = sld [smem:[#allocation6 + $0x2]]
        %v419 = vstv %s418
        %v420 = vmul.f32 %v416, %v419
        %v421 = vmul.f32 %v417, %v419
        %v422 = vadd.f32 %v413, %v420
        %v423 = vadd.f32 %v414, %v421
        %s424 = scalar_lea.vmem %s369, 48
        %v425 = vld [vmem:[%s424] sm:$0xff]
        %v426 = vld [vmem:[%s424 + $0x8] sm:$0xff]
        %s427 = sld [smem:[#allocation6 + $0x3]]
        %v428 = vstv %s427
        %v429 = vmul.f32 %v425, %v428
        %v430 = vmul.f32 %v426, %v428
        %v431 = vadd.f32 %v422, %v429
        %v432 = vadd.f32 %v423, %v430
        %v433 = vld [vmem:[%s375] sm:$0xff]
        %v434 = vld [vmem:[%s375 + $0x8] sm:$0xff]
        %v435 = vld [vmem:[%s6] sm:$0xff]
        %vm436 = vcmask 64512
        %v438 = vsel %vm436, %v399, 0
        %440 = vmatprep.subr.mxu0 0.0
        %441 = vmatpush1.msra.mxu0 %v435
        %442 = vmatprep.subr.mxu0 0.0
        %443 = vmatpush1.msra.mxu0 0.0
        %444 = vmatprep.subr.mxu0 0.0
        %445 = vmatpush1.msra.mxu0 0.0
        %446 = vmatprep.subr.mxu0 0.0
        %447 = vmatpush1.msra.mxu0 0.0
        %448 = vmatprep.subr.mxu0 0.0
        %449 = vmatpush1.msra.mxu0 0.0
        %450 = vmatprep.subr.mxu0 0.0
        %451 = vmatpush1.msra.mxu0 0.0
        %452 = vmatprep.subr.mxu0 0.0
        %453 = vmatpush1.msra.mxu0 0.0
        %454 = vmatprep.subr.mxu0 0.0
        %455 = vmatpush1.msra.mxu0 0.0
        %456 = vmatprep.subr.mxu0 0.0
        %457 = vmatpush1.msra.mxu0 0.0
        %458 = vmatprep.subr.mxu0 0.0
        %459 = vmatpush1.msra.mxu0 0.0
        %460 = vmatprep.subr.mxu0 0.0
        %461 = vmatpush1.msra.mxu0 0.0
        %462 = vmatprep.subr.mxu0 0.0
        %463 = vmatpush1.msra.mxu0 0.0
        %464 = vmatprep.subr.mxu0 0.0
        %465 = vmatpush1.msra.mxu0 0.0
        %466 = vmatprep.subr.mxu0 0.0
        %467 = vmatpush1.msra.mxu0 0.0
        %468 = vmatprep.subr.mxu0 0.0
        %469 = vmatpush1.msra.mxu0 0.0
        %470 = vmatprep.subr.mxu0 0.0
        %471 = vmatpush1.msra.mxu0 0.0
        %472 = vmatprep.subr.mxu0 0.0
        %473 = vmatpush1.msra.mxu0 0.0
        %474 = vmatprep.subr.mxu0 0.0
        %475 = vmatpush1.msra.mxu0 0.0
        %476 = vmatprep.subr.mxu0 0.0
        %477 = vmatpush1.msra.mxu0 0.0
        %478 = vmatprep.subr.mxu0 0.0
        %479 = vmatpush1.msra.mxu0 0.0
        %480 = vmatprep.subr.mxu0 0.0
        %481 = vmatpush1.msra.mxu0 0.0
        %482 = vmatprep.subr.mxu0 0.0
        %483 = vmatpush1.msra.mxu0 0.0
        %484 = vmatprep.subr.mxu0 0.0
        %485 = vmatpush1.msra.mxu0 0.0
        %486 = vmatprep.subr.mxu0 0.0
        %487 = vmatpush1.msra.mxu0 0.0
        %488 = vmatprep.subr.mxu0 0.0
        %489 = vmatpush1.msra.mxu0 0.0
        %490 = vmatprep.subr.mxu0 0.0
        %491 = vmatpush1.msra.mxu0 0.0
        %492 = vmatprep.subr.mxu0 0.0
        %493 = vmatpush1.msra.mxu0 0.0
        %494 = vmatprep.subr.mxu0 0.0
        %495 = vmatpush1.msra.mxu0 0.0
        %496 = vmatprep.subr.mxu0 0.0
        %497 = vmatpush1.msra.mxu0 0.0
        %498 = vmatprep.subr.mxu0 0.0
        %499 = vmatpush1.msra.mxu0 0.0
        %500 = vmatprep.subr.mxu0 0.0
        %501 = vmatpush1.msra.mxu0 0.0
        %502 = vmatprep.subr.mxu0 0.0
        %503 = vmatpush1.msra.mxu0 0.0
        %504 = vmatprep.mubr.f32.mxu0 0.0
        %505 = vmatmul.mubr.f32.gmra.mrb[0].mxu0 %v438
        %v506 = vpop.f32.mrb[0].mxu0
        %v507 = vadd.f32 0.0, %v506
        %v508 = vpop.f32.mrb[0].mxu0
        %509 = vdwg.mxu0
        %v511 = vsel %vm436, %v433, 0
        %v514 = vsel %vm436, %v434, 0
        %516 = vmatprep.subr.mxu0 0.0
        %517 = vmatpush1.msra.mxu0 %v507
        %518 = vmatprep.subr.mxu0 0.0
        %519 = vmatpush1.msra.mxu0 0.0
        %520 = vmatprep.subr.mxu0 0.0
        %521 = vmatpush1.msra.mxu0 0.0
        %522 = vmatprep.subr.mxu0 0.0
        %523 = vmatpush1.msra.mxu0 0.0
        %524 = vmatprep.subr.mxu0 0.0
        %525 = vmatpush1.msra.mxu0 0.0
        %526 = vmatprep.subr.mxu0 0.0
        %527 = vmatpush1.msra.mxu0 0.0
        %528 = vmatprep.subr.mxu0 0.0
        %529 = vmatpush1.msra.mxu0 0.0
        %530 = vmatprep.subr.mxu0 0.0
        %531 = vmatpush1.msra.mxu0 0.0
        %532 = vmatprep.subr.mxu0 0.0
        %533 = vmatpush1.msra.mxu0 0.0
        %534 = vmatprep.subr.mxu0 0.0
        %535 = vmatpush1.msra.mxu0 0.0
        %536 = vmatprep.subr.mxu0 0.0
        %537 = vmatpush1.msra.mxu0 0.0
        %538 = vmatprep.subr.mxu0 0.0
        %539 = vmatpush1.msra.mxu0 0.0
        %540 = vmatprep.subr.mxu0 0.0
        %541 = vmatpush1.msra.mxu0 0.0
        %542 = vmatprep.subr.mxu0 0.0
        %543 = vmatpush1.msra.mxu0 0.0
        %544 = vmatprep.subr.mxu0 0.0
        %545 = vmatpush1.msra.mxu0 0.0
        %546 = vmatprep.subr.mxu0 0.0
        %547 = vmatpush1.msra.mxu0 0.0
        %548 = vmatprep.subr.mxu0 0.0
        %549 = vmatpush1.msra.mxu0 0.0
        %550 = vmatprep.subr.mxu0 0.0
        %551 = vmatpush1.msra.mxu0 0.0
        %552 = vmatprep.subr.mxu0 0.0
        %553 = vmatpush1.msra.mxu0 0.0
        %554 = vmatprep.subr.mxu0 0.0
        %555 = vmatpush1.msra.mxu0 0.0
        %556 = vmatprep.subr.mxu0 0.0
        %557 = vmatpush1.msra.mxu0 0.0
        %558 = vmatprep.subr.mxu0 0.0
        %559 = vmatpush1.msra.mxu0 0.0
        %560 = vmatprep.subr.mxu0 0.0
        %561 = vmatpush1.msra.mxu0 0.0
        %562 = vmatprep.subr.mxu0 0.0
        %563 = vmatpush1.msra.mxu0 0.0
        %564 = vmatprep.subr.mxu0 0.0
        %565 = vmatpush1.msra.mxu0 0.0
        %566 = vmatprep.subr.mxu0 0.0
        %567 = vmatpush1.msra.mxu0 0.0
        %568 = vmatprep.subr.mxu0 0.0
        %569 = vmatpush1.msra.mxu0 0.0
        %570 = vmatprep.subr.mxu0 0.0
        %571 = vmatpush1.msra.mxu0 0.0
        %572 = vmatprep.subr.mxu0 0.0
        %573 = vmatpush1.msra.mxu0 0.0
        %574 = vmatprep.subr.mxu0 0.0
        %575 = vmatpush1.msra.mxu0 0.0
        %576 = vmatprep.subr.mxu0 0.0
        %577 = vmatpush1.msra.mxu0 0.0
        %578 = vmatprep.subr.mxu0 0.0
        %579 = vmatpush1.msra.mxu0 0.0
        %580 = vmatprep.mubr.f32.mxu0 0.0
        %581 = vmatmul.mubr.f32.gmra.mrb[0].mxu0 %v511
        %v582 = vpop.f32.mrb[0].mxu0
        %v583 = vadd.f32 0.0, %v582
        %v584 = vpop.f32.mrb[0].mxu0
        %585 = vmatprep.mubr.f32.mxu0 0.0
        %586 = vmatmul.mubr.f32.gmra.mrb[0].mxu0 %v514
        %v587 = vpop.f32.mrb[0].mxu0
        %v588 = vadd.f32 0.0, %v587
        %v589 = vpop.f32.mrb[0].mxu0
        %590 = vdwg.mxu0
        %v591 = vadd.f32 %v431, %v583
        %v592 = vadd.f32 %v432, %v588
        %s593 = sld [smem:[#allocation2]]
        %v594 = vstv %s593
        %v595 = vadd.f32 %v591, %v594
        %v596 = vadd.f32 %v592, %v594
        %v597 = vmax.f32 %v595, 0.0
        %v598 = vmax.f32 %v596, 0.0
        %vm599 = vcmask 130048
        %600 = vst.msk [vmem:[%s355] sm:$0xff] %vm599, %v597
        %601 = vst.msk [vmem:[%s355 + $0x8] sm:$0xff] %vm599, %v598
        %s602 = sand.u32 %s210, 1
        %s603 = scalar_lea.sflag [#allocation4], %s602
        %s604 = sand.u32 %s210, 1
        %s605 = smul.addr %s604, 16
        %s606 = scalar_lea.vmem [#allocation8], %s605
        // Predicated region
        $region57: #{decoder_pred_forward.1} parent=47 // pred_check
          %p607 = pneg %p220
        $region58: #{decoder_pred_forward.1} parent=47 // pred_check_branch
          %609 = sbr.rel (%p607) target = $region60
        $region59: #{decoder_pred_forward.1} parent=47 // pred_region
          %s610 = smul.u32 2, %s29
          %s612 = ssub.s32 256, 256
          %613 = vsyncadd %s603, %s612
          %s614 = smul.addr %s28, 2
          %s615 = sadd.s32 %s610, %s614
          %s616 = smul.addr %s615, 128
          %s617 = scalar_lea.hbm %s7, %s616
          %s618 = sshll.u32 %s606, 4
          %s619 = int_to_ptr.vmem [resolvable:$true] %s618
          %624 = dma.vmem_to_hbm [thread:$0]  %s619, 256, %s617, %s603, 128, 128, 8
        $region60: #{decoder_pred_forward.1} parent=47 // pred_fallthru
          _
      $region48: #{decoder_pred_forward.1} parent=5 // pred_fallthru
        _
      %p625 = scmp.le.s32.totalorder 2, %s19
      // Predicated region
      $region61: #{decoder_pred_forward.1} parent=5 // pred_check
        %p626 = pneg %p625
      $region62: #{decoder_pred_forward.1} parent=5 // pred_check_branch
        %628 = sbr.rel (%p626) target = $region64
      $region63: #{decoder_pred_forward.1} parent=5 // pred_region
        %s629 = ssub.s32 %s19, 2
        // Predicated region
        $region65: #{decoder_pred_forward.1} parent=63 // pred_check
          %p630 = pneg %p226
        $region66: #{decoder_pred_forward.1} parent=63 // pred_check_branch
          %632 = sbr.rel (%p630) target = $region68
        $region67: #{decoder_pred_forward.1} parent=63 // pred_region
          %s633 = sand.u32 %s211, 1
          %s634 = scalar_lea.sflag [#allocation4], %s633
          %s635 = sand.u32 %s211, 1
          %s636 = smul.addr %s635, 16
          %s637 = scalar_lea.vmem [#allocation8], %s636
          %638 = dma.done %s634, 256
        $region68: #{decoder_pred_forward.1} parent=63 // pred_fallthru
          _
      $region64: #{decoder_pred_forward.1} parent=5 // pred_fallthru
        _
    $region6: #{decoder_pred_forward.1} parent=1 // loop_footer
      %s23 = sadd.s32 1, %s19
    $region7: #{decoder_pred_forward.1} parent=1 // loop_footer_branch
      %18 = sbr.rel target = $region3
    $region8: #{decoder_pred_forward.1} parent=1 // loop_exit
      _
    %639 = vsyncpa [#allocation4], 1
    %s640 = scalar_lea.sflag [#allocation4], 1
    %641 = vsyncpa %s640, 1
    %642 = vsyncpa [#allocation5], 1
    %s643 = scalar_lea.sflag [#allocation5], 1
    %644 = vsyncpa %s643, 1
    %645 = vsyncpa [#allocation7], 1

</llo_original>
